<compile_context>
chip_gen: v7x
topology: tpu7x:2x2x1
jax: 0.10.0
libtpu: 0.0.40
codegen_flags: <defaults>
</compile_context>

<pallas_src>
import jax
import jax.numpy as jnp
from jax.experimental import pallas as pl
from jax.experimental.pallas import tpu as pltpu


def _make_kernel(chunk: int, n_chunks: int):
    """Builds the kernel for a given static lane-chunking of the x tile."""

    def kernel(x_ref, wbd_ref, bbd_ref, wcls_ref, bfold_ref, o_ref, acc_ref):
        # x_ref    : [TN*C, THW]   f32   activation tile (lane-dense, sublane-dense)
        # wbd_ref  : [TN*F, TN*C]  bf16  block-diagonal 1x1-conv weight (resident)
        # bbd_ref  : [TN*F, 1]     f32   conv bias, tiled per n-row (resident)
        # wcls_ref : [TN, TN*F]    f32   block-diag folded BN+Linear+1/HW classifier
        # bfold_ref: [1, 1]        f32   folded classifier bias
        # o_ref    : [TN, 1]       f32   logits
        # acc_ref  : [TN, 1]       f32   VMEM accumulator (sum over HW tiles/chunks)
        hw = pl.program_id(1)

        @pl.when(hw == 0)
        def _init():
            acc_ref[...] = jnp.zeros_like(acc_ref)

        w_bd = wbd_ref[...]          # hoisted loads of the resident weights
        b_bd = bbd_ref[...]
        w_cls = wcls_ref[...]

        def compute(x_chunk_f32):
            xc = x_chunk_f32.astype(jnp.bfloat16)               # in-kernel cast
            # ONE MXU matmul for the whole n-tile: [TN*F, TN*C] @ [TN*C, CHUNK].
            feat = jnp.dot(w_bd, xc,
                           preferred_element_type=jnp.float32)  # [TN*F, CHUNK] f32
            relu = jnp.maximum(feat + b_bd, 0.0)                # bias + ReLU (VPU, f32)
            # Classifier contraction over F on the MXU (f32 operands keep the folded
            # BN scales at full precision; MXU has slack here, the VPU does not).
            s = jnp.dot(w_cls, relu,
                        preferred_element_type=jnp.float32)     # [TN, CHUNK] f32
            acc_ref[...] += jnp.sum(s, axis=-1, keepdims=True)  # tiny lane reduce

        if n_chunks == 1:
            compute(x_ref[...])
        else:
            # Static (fully unrolled, <=4 iters) chunk loop over the big DMA tile:
            # static ref slices are free views; the f32 feat working set stays small.
            for ci in range(n_chunks):
                compute(x_ref[:, ci * chunk:(ci + 1) * chunk])

        @pl.when(hw == pl.num_programs(1) - 1)
        def _finalize():
            o_ref[...] = (acc_ref[...] + bfold_ref[...]).astype(o_ref.dtype)

    return kernel


def siamese_tuning_forward(x_nchw, params):
    """x_nchw: [N, C, H, W] float32 (PyTorch conv layout)."""
    N, C, H, W = x_nchw.shape
    HW = H * W
    F = params["w_feat"].shape[0]

    # ---------------- tiling ----------------
    # TN*C (second-minor of the x block) and TN (second-minor of the out block) must
    # each be a multiple of 8 or equal the full dim.  TN = 8 satisfies both for any C;
    # otherwise fall back to the full batch (block == full dims is always legal).
    TN = 8 if N % 8 == 0 else N
    # TODO(synk): on v7x (2 TensorCores) prefer N//TN >= 2 so both cores get work;
    # for N < 16 the parallel axis has a single block (irrelevant on v5e/v6e: 1 TC).

    THW = HW
    for cand in (2048, 1024, 512, 256, 128):      # large, lane-aligned DMA tiles
        if HW % cand == 0:
            THW = cand
            break
    CHUNK = 512 if (THW > 512 and THW % 512 == 0) else THW
    n_chunks = THW // CHUNK

    # ---------------- parameter folding (wrapper-side, tiny) ----------------
    w_feat = params["w_feat"].astype(jnp.float32)                  # [F, C]
    b_feat = params["b_feat"].astype(jnp.float32)                  # [F]
    inv_std = jax.lax.rsqrt(params["bn_var"].astype(jnp.float32) + 1e-5)
    scale = inv_std * params["bn_gamma"].astype(jnp.float32)       # [F]
    w_cls = params["w_cls"].reshape(F).astype(jnp.float32)
    b_cls = params["b_cls"].reshape(()).astype(jnp.float32)
    # BatchNorm1d(eval) + Linear(F->1) + 1/HW of the average pool folded so that
    #   logits[n] = sum_{f,hw} w_fold[f] * relu_feat[n, f, hw] + b_fold
    w_fold = (scale * w_cls) / HW                                   # [F]
    b_fold = (b_cls + jnp.sum((params["bn_beta"].astype(jnp.float32)
                               - params["bn_mean"].astype(jnp.float32) * scale)
                              * w_cls)).reshape(1, 1)

    # Block-diagonal expansion over the TN rows of one tile: the kernel then needs
    # exactly ONE 2-D matmul per chunk for features and ONE for the classifier.
    eye = jnp.eye(TN, dtype=jnp.float32)
    w_bd = jnp.einsum("nm,fc->nfmc", eye, w_feat).reshape(TN * F, TN * C)
    w_bd = w_bd.astype(jnp.bfloat16)                                # [TN*F, TN*C]
    b_bd = jnp.tile(b_feat, TN).reshape(TN * F, 1)                  # [TN*F, 1]
    w_cls_bd = jnp.einsum("nm,f->nmf", eye, w_fold).reshape(TN, TN * F)   # f32

    # Free, contiguous reshape; x stays f32 in HBM (bf16 cast happens in-kernel).
    x2 = x_nchw.reshape(N * C, HW).astype(jnp.float32)

    kernel = _make_kernel(CHUNK, n_chunks)

    out = pl.pallas_call(
        kernel,
        out_shape=jax.ShapeDtypeStruct((N, 1), jnp.float32),
        grid_spec=pltpu.PrefetchScalarGridSpec(
            num_scalar_prefetch=0,
            grid=(N // TN, HW // THW),
            in_specs=[
                pl.BlockSpec((TN * C, THW), lambda n, h: (n, h)),       # x tiles
                pl.BlockSpec((TN * F, TN * C), lambda n, h: (0, 0)),    # conv weight
                pl.BlockSpec((TN * F, 1), lambda n, h: (0, 0)),         # conv bias
                pl.BlockSpec((TN, TN * F), lambda n, h: (0, 0)),        # folded cls W
                pl.BlockSpec((1, 1), lambda n, h: (0, 0)),              # folded cls b
            ],
            out_specs=pl.BlockSpec((TN, 1), lambda n, h: (n, 0)),
            scratch_shapes=[pltpu.VMEM((TN, 1), jnp.float32)],
        ),
        compiler_params=pltpu.CompilerParams(
            dimension_semantics=("parallel", "arbitrary"),
            # Explicit, portable limit: well under v7x's 64 MiB physical VMEM and
            # above v5e's 16 MiB default scoped limit (tile caps keep usage < 4 MiB).
            vmem_limit_bytes=32 * 1024 * 1024,
        ),
    )(x2, w_bd, b_bd, w_cls_bd, b_fold)
    return out


def make_params(key, in_ch, num_feat):
    ks = jax.random.split(key, 8)
    # Feature extractor: 1x1 conv weight stored as [F, C], bias [F].
    w_feat = jax.random.normal(ks[0], (num_feat, in_ch), jnp.float32) * 0.2
    b_feat = jax.random.normal(ks[1], (num_feat,), jnp.float32) * 0.1
    # BatchNorm1d(num_feat): affine params + running stats (deterministic, nontrivial).
    bn_gamma = 1.0 + 0.1 * jax.random.normal(ks[2], (num_feat,), jnp.float32)
    bn_beta = 0.1 * jax.random.normal(ks[3], (num_feat,), jnp.float32)
    bn_mean = 0.05 * jax.random.normal(ks[4], (num_feat,), jnp.float32)
    bn_var = 1.0 + 0.1 * jnp.abs(jax.random.normal(ks[5], (num_feat,), jnp.float32))
    # Linear(num_feat, 1): torch-style weight [1, F], bias [1].
    w_cls = jax.random.normal(ks[6], (1, num_feat), jnp.float32) * 0.2
    b_cls = jnp.full((1,), 0.01, jnp.float32)
    return dict(w_feat=w_feat, b_feat=b_feat,
                bn_gamma=bn_gamma, bn_beta=bn_beta,
                bn_mean=bn_mean, bn_var=bn_var,
                w_cls=w_cls, b_cls=b_cls)


def reference_forward(x_nchw, p):
    """Plain-JAX reference with the same (eval-mode BN, bf16 feature matmul) math."""
    N, C, H, W = x_nchw.shape
    HW = H * W
    F = p["w_feat"].shape[0]
    x = x_nchw.reshape(N, C, HW).astype(jnp.bfloat16)
    w = p["w_feat"].astype(jnp.bfloat16)
    feat = jnp.einsum("fc,ncl->nfl", w, x, preferred_element_type=jnp.float32)
    feat = jnp.maximum(feat + p["b_feat"].reshape(1, F, 1), 0.0)
    pooled = jnp.mean(feat, axis=-1)                                        # [N, F]
    inv_std = jax.lax.rsqrt(p["bn_var"] + 1e-5)
    normed = (pooled - p["bn_mean"]) * inv_std * p["bn_gamma"] + p["bn_beta"]
    return normed @ p["w_cls"].T + p["b_cls"]                               # [N, 1]


if __name__ == "__main__":
    key = jax.random.PRNGKey(0)
    k_x, k_p = jax.random.split(key)

    N, C, H, W = 2, 4, 16, 16          # NCHW input like PyTorch
    num_feat = 32

    x = jax.random.normal(k_x, (N, C, H, W), jnp.float32)
    params = make_params(k_p, C, num_feat)

    out = jax.block_until_ready(siamese_tuning_forward(x, params))
    ref = reference_forward(x, params)

    assert out.shape == (N, 1)
    assert jnp.allclose(out, ref, rtol=1e-2, atol=1e-2), (out, ref)

    print("KERNEL_OK")
</pallas_src>

<mosaic_0001>
module attributes {stable_mosaic.version = 11 : i64} {
  func.func @kernel(%arg0: i32, %arg1: i32, %arg2: memref<8x256xf32, #tpu.memory_space<vmem>>, %arg3: memref<64x8xbf16, #tpu.memory_space<vmem>>, %arg4: memref<64x1xf32, #tpu.memory_space<vmem>>, %arg5: memref<2x64xf32, #tpu.memory_space<vmem>>, %arg6: memref<1x1xf32, #tpu.memory_space<vmem>>, %arg7: memref<2x1xf32, #tpu.memory_space<vmem>>, %arg8: memref<2x1xf32, #tpu.memory_space<vmem>>) attributes {dimension_semantics = [#tpu.dimension_semantics<parallel>, #tpu.dimension_semantics<arbitrary>], iteration_bounds = array<i64: 1, 1>, scalar_prefetch = 0 : i64, scratch_operands = 1 : i64, tpu.core_type = #tpu.core_type<tc>, window_params = [{transform_indices = @transform_0, window_bounds = array<i64: 8, 256>}, {pipeline_mode = #tpu.pipeline_mode<synchronous>, transform_indices = @transform_1, window_bounds = array<i64: 64, 8>}, {pipeline_mode = #tpu.pipeline_mode<synchronous>, transform_indices = @transform_2, window_bounds = array<i64: 64, 1>}, {pipeline_mode = #tpu.pipeline_mode<synchronous>, transform_indices = @transform_3, window_bounds = array<i64: 2, 64>}, {pipeline_mode = #tpu.pipeline_mode<synchronous>, transform_indices = @transform_4, window_bounds = array<i64: 1, 1>}, {transform_indices = @transform_5, window_bounds = array<i64: 2, 1>}]} {
    %c0_i32 = arith.constant 0 : i32
    %0 = arith.cmpi eq, %arg1, %c0_i32 : i32
    %1 = arith.extui %0 : i1 to i32
    %c0_i32_0 = arith.constant 0 : i32
    %2 = arith.cmpi ne, %1, %c0_i32_0 : i32
    scf.if %2 {
      %cst_17 = arith.constant 0.000000e+00 : f32
      %22 = vector.broadcast %cst_17 : f32 to vector<2x1xf32>
      %c0_18 = arith.constant 0 : index
      %c0_19 = arith.constant 0 : index
      %23 = vector.load %arg8[%c0_18, %c0_19] : memref<2x1xf32, #tpu.memory_space<vmem>>, vector<2x1xf32>
      tpu.vector_store %arg8[%c0_18, %c0_19], %22 {strides = array<i32>} : memref<2x1xf32, #tpu.memory_space<vmem>>, vector<2x1xf32>,
    } else {
    }
    %c0 = arith.constant 0 : index
    %c0_1 = arith.constant 0 : index
    %3 = vector.load %arg3[%c0, %c0_1] : memref<64x8xbf16, #tpu.memory_space<vmem>>, vector<64x8xbf16>
    %c0_2 = arith.constant 0 : index
    %c0_3 = arith.constant 0 : index
    %4 = vector.load %arg4[%c0_2, %c0_3] : memref<64x1xf32, #tpu.memory_space<vmem>>, vector<64x1xf32>
    %c0_4 = arith.constant 0 : index
    %c0_5 = arith.constant 0 : index
    %5 = vector.load %arg5[%c0_4, %c0_5] : memref<2x64xf32, #tpu.memory_space<vmem>>, vector<2x64xf32>
    %c0_6 = arith.constant 0 : index
    %c0_7 = arith.constant 0 : index
    %6 = vector.load %arg2[%c0_6, %c0_7] : memref<8x256xf32, #tpu.memory_space<vmem>>, vector<8x256xf32>
    %7 = arith.truncf %6 : vector<8x256xf32> to vector<8x256xbf16>
    %cst = arith.constant dense<0.000000e+00> : vector<64x256xf32>
    %8 = tpu.matmul %3, %7, %cst {dimension_numbers = #tpu.dot_dimension_numbers<[1], [0], [0], [1], [0, 0, 1, 1], [], []>} : vector<64x8xbf16>, vector<8x256xbf16>, vector<64x256xf32> -> vector<64x256xf32>
    %9 = vector.broadcast %4 : vector<64x1xf32> to vector<64x256xf32>
    %10 = arith.addf %8, %9 : vector<64x256xf32>
    %cst_8 = arith.constant 0.000000e+00 : f32
    %11 = vector.broadcast %cst_8 : f32 to vector<64x256xf32>
    %12 = arith.maximumf %10, %11 : vector<64x256xf32>
    %cst_9 = arith.constant dense<0.000000e+00> : vector<2x256xf32>
    %13 = tpu.matmul %5, %12, %cst_9 {dimension_numbers = #tpu.dot_dimension_numbers<[1], [0], [0], [1], [0, 0, 1, 1], [], []>} : vector<2x64xf32>, vector<64x256xf32>, vector<2x256xf32> -> vector<2x256xf32>
    %c0_10 = arith.constant 0 : index
    %c0_11 = arith.constant 0 : index
    %14 = vector.load %arg8[%c0_10, %c0_11] : memref<2x1xf32, #tpu.memory_space<vmem>>, vector<2x1xf32>
    %cst_12 = arith.constant dense<0.000000e+00> : vector<2xf32>
    %15 = vector.multi_reduction <add>, %13, %cst_12 [1] : vector<2x256xf32> to vector<2xf32>
    %16 = vector.shape_cast %15 : vector<2xf32> to vector<2x1xf32>
    %17 = arith.addf %14, %16 : vector<2x1xf32>
    %c0_13 = arith.constant 0 : index
    %c0_14 = arith.constant 0 : index
    %18 = vector.load %arg8[%c0_13, %c0_14] : memref<2x1xf32, #tpu.memory_space<vmem>>, vector<2x1xf32>
    tpu.vector_store %arg8[%c0_13, %c0_14], %17 {strides = array<i32>} : memref<2x1xf32, #tpu.memory_space<vmem>>, vector<2x1xf32>,
    %c0_i32_15 = arith.constant 0 : i32
    %19 = arith.cmpi eq, %arg1, %c0_i32_15 : i32
    %20 = arith.extui %19 : i1 to i32
    %c0_i32_16 = arith.constant 0 : i32
    %21 = arith.cmpi ne, %20, %c0_i32_16 : i32
    scf.if %21 {
      %c0_17 = arith.constant 0 : index
      %c0_18 = arith.constant 0 : index
      %22 = vector.load %arg8[%c0_17, %c0_18] : memref<2x1xf32, #tpu.memory_space<vmem>>, vector<2x1xf32>
      %c0_19 = arith.constant 0 : index
      %c0_20 = arith.constant 0 : index
      %23 = vector.load %arg6[%c0_19, %c0_20] : memref<1x1xf32, #tpu.memory_space<vmem>>, vector<1x1xf32>
      %24 = vector.broadcast %23 : vector<1x1xf32> to vector<2x1xf32>
      %25 = arith.addf %22, %24 : vector<2x1xf32>
      %c0_21 = arith.constant 0 : index
      %c0_22 = arith.constant 0 : index
      %26 = vector.load %arg7[%c0_21, %c0_22] : memref<2x1xf32, #tpu.memory_space<vmem>>, vector<2x1xf32>
      tpu.vector_store %arg7[%c0_21, %c0_22], %25 {strides = array<i32>} : memref<2x1xf32, #tpu.memory_space<vmem>>, vector<2x1xf32>,
    } else {
    }
    return
  }
  func.func @transform_0(%arg0: i32, %arg1: i32) -> (i32, i32) {
    %c0_i32 = arith.constant 0 : i32
    return %arg0, %arg1 : i32, i32
  }
  func.func @transform_1(%arg0: i32, %arg1: i32) -> (i32, i32) {
    %c0_i32 = arith.constant 0 : i32
    %c0_i32_0 = arith.constant 0 : i32
    %c0_i32_1 = arith.constant 0 : i32
    return %c0_i32, %c0_i32_0 : i32, i32
  }
  func.func @transform_2(%arg0: i32, %arg1: i32) -> (i32, i32) {
    %c0_i32 = arith.constant 0 : i32
    %c0_i32_0 = arith.constant 0 : i32
    %c0_i32_1 = arith.constant 0 : i32
    return %c0_i32, %c0_i32_0 : i32, i32
  }
  func.func @transform_3(%arg0: i32, %arg1: i32) -> (i32, i32) {
    %c0_i32 = arith.constant 0 : i32
    %c0_i32_0 = arith.constant 0 : i32
    %c0_i32_1 = arith.constant 0 : i32
    return %c0_i32, %c0_i32_0 : i32, i32
  }
  func.func @transform_4(%arg0: i32, %arg1: i32) -> (i32, i32) {
    %c0_i32 = arith.constant 0 : i32
    %c0_i32_0 = arith.constant 0 : i32
    %c0_i32_1 = arith.constant 0 : i32
    return %c0_i32, %c0_i32_0 : i32, i32
  }
  func.func @transform_5(%arg0: i32, %arg1: i32) -> (i32, i32) {
    %c0_i32 = arith.constant 0 : i32
    %c0_i32_0 = arith.constant 0 : i32
    return %arg0, %c0_i32 : i32, i32
  }
}

</mosaic_0001>

<llo_original>
// kernel: tpu_custom_call.1
$region0: #{tpu_custom_call.1}
  #allocation0 [shape = 'u32[]', space=smem, size = 0x4, offset = 0x4, fixed_abs, tag = 'smem constant byte address 0x4 - core index']
  #allocation1 [shape = 'u32[144,128]{1,0:T(1,128)}', space=vmem, size = 0x12000, scoped, tag = 'internal scratch']
  #allocation2 [shape = 'f32[2,1]{1,0:T(2,128)}', space=vmem, size = 0x400, scoped, tag = 'scratch operand']
  #allocation3 [shape = 'f32[1,1]{1,0:T(1,128)S(1)}', space=vmem, size = 0x200, scoped, tag = 'scoped memory for tpu_custom_call.1']
  %s0 = inlined_call_operand.vmem [shape: f32[8,256], index: 0, kind: input, shape index: {}]
  %s1 = inlined_call_operand.vmem [shape: bf16[64,8], index: 1, kind: input, shape index: {}]
  %s2 = inlined_call_operand.vmem [shape: f32[64,1], index: 2, kind: input, shape index: {}]
  %s3 = inlined_call_operand.vmem [shape: f32[2,64], index: 3, kind: input, shape index: {}]
  %s4 = inlined_call_operand.<no memory space> [shape: f32[1,1], index: 4, kind: input, shape index: {}]
  %s5 = inlined_call_operand.vmem [shape: f32[2,1], index: 5, kind: output, shape index: {}]
  %s6 = sld [smem:[#allocation0]]
  $region38: #{tpu_custom_call.1} parent=0
    _
  %s8 = ssub.s32 1, %s6
  %s9 = scalar_select 0, %s8, %s6
  %v10 = vstv %s4
  %11 = vst [vmem:[#allocation3] sm:$0x1] %v10
  // Predicated region
  $region2: #{tpu_custom_call.1} parent=0 // pred_check
    _
  $region3: #{tpu_custom_call.1} parent=0 // pred_check_branch
    %13 = sbr.rel (0) target = $region5
  $region4: #{tpu_custom_call.1} parent=0 // pred_region
    _
  $region5: #{tpu_custom_call.1} parent=0 // pred_fallthru
    _
  // Predicated region
  $region6: #{tpu_custom_call.1} parent=0 // pred_check
    _
  $region7: #{tpu_custom_call.1} parent=0 // pred_check_branch
    %15 = sbr.rel (0) target = $region9
  $region8: #{tpu_custom_call.1} parent=0 // pred_region
    _
  $region9: #{tpu_custom_call.1} parent=0 // pred_fallthru
    _
  // Predicated region
  $region10: #{tpu_custom_call.1} parent=0 // pred_check
    _
  $region11: #{tpu_custom_call.1} parent=0 // pred_check_branch
    %17 = sbr.rel (0) target = $region13
  $region12: #{tpu_custom_call.1} parent=0 // pred_region
    _
  $region13: #{tpu_custom_call.1} parent=0 // pred_fallthru
    _
  // Predicated region
  $region14: #{tpu_custom_call.1} parent=0 // pred_check
    _
  $region15: #{tpu_custom_call.1} parent=0 // pred_check_branch
    %19 = sbr.rel (0) target = $region17
  $region16: #{tpu_custom_call.1} parent=0 // pred_region
    _
  $region17: #{tpu_custom_call.1} parent=0 // pred_fallthru
    _
  // Predicated region
  $region18: #{tpu_custom_call.1} parent=0 // pred_check
    _
  $region19: #{tpu_custom_call.1} parent=0 // pred_check_branch
    %21 = sbr.rel (0) target = $region21
  $region20: #{tpu_custom_call.1} parent=0 // pred_region
    _
  $region21: #{tpu_custom_call.1} parent=0 // pred_fallthru
    _
  %p23 = scmp.eq.s32.totalorder 0, 0
  // Predicated region
  $region22: #{tpu_custom_call.1} parent=0 // pred_check
    %p24 = pneg %p23
  $region23: #{tpu_custom_call.1} parent=0 // pred_check_branch
    %26 = sbr.rel (%p24) target = $region25
  $region24: #{tpu_custom_call.1} parent=0 // pred_region
    %vm27 = vcmask 1024
    %28 = vst.msk [vmem:[#allocation2] sm:$0x3] %vm27, 0.0
  $region25: #{tpu_custom_call.1} parent=0 // pred_fallthru
    _
  %v29 = vld [vmem:[%s1] sm:$0xf]
  %v30 = vld [vmem:[%s1 + $0x4] sm:$0xf]
  %v31 = vld [vmem:[%s1 + $0x8] sm:$0xf]
  %v32 = vld [vmem:[%s1 + $0xc] sm:$0xf]
  %v33 = vld [vmem:[%s1 + $0x10] sm:$0xf]
  %v34 = vld [vmem:[%s1 + $0x14] sm:$0xf]
  %v35 = vld [vmem:[%s1 + $0x18] sm:$0xf]
  %v36 = vld [vmem:[%s1 + $0x1c] sm:$0xf]
  %v37 = vld [vmem:[%s2] sm:$0xff]
  %v38 = vld [vmem:[%s2 + $0x8] sm:$0xff]
  %v39 = vld [vmem:[%s2 + $0x10] sm:$0xff]
  %v40 = vld [vmem:[%s2 + $0x18] sm:$0xff]
  %v41 = vld [vmem:[%s2 + $0x20] sm:$0xff]
  %v42 = vld [vmem:[%s2 + $0x28] sm:$0xff]
  %v43 = vld [vmem:[%s2 + $0x30] sm:$0xff]
  %v44 = vld [vmem:[%s2 + $0x38] sm:$0xff]
  %v45 = vld [vmem:[%s3] sm:$0x3]
  %v46 = vld [vmem:[%s0] sm:$0xff]
  %v47 = vld [vmem:[%s0 + $0x8] sm:$0xff]
  %v48 = vpack.c.bf16 %v46, %v46
  %v49 = vpack.c.bf16 %v47, %v47
  %51 = vset.pattern.permute.xlu0 0
  %52 = vperm.xlu0 %51, %v37
  %v53 = vpop.permute.xlu0 %52
  %56 = vset.pattern.permute.xlu0 0
  %57 = vperm.xlu0 %56, %v38
  %v58 = vpop.permute.xlu0 %57
  %61 = vset.pattern.permute.xlu0 0
  %62 = vperm.xlu0 %61, %v39
  %v63 = vpop.permute.xlu0 %62
  %66 = vset.pattern.permute.xlu0 0
  %67 = vperm.xlu0 %66, %v40
  %v68 = vpop.permute.xlu0 %67
  %71 = vset.pattern.permute.xlu0 0
  %72 = vperm.xlu0 %71, %v41
  %v73 = vpop.permute.xlu0 %72
  %76 = vset.pattern.permute.xlu0 0
  %77 = vperm.xlu0 %76, %v42
  %v78 = vpop.permute.xlu0 %77
  %81 = vset.pattern.permute.xlu0 0
  %82 = vperm.xlu0 %81, %v43
  %v83 = vpop.permute.xlu0 %82
  %86 = vset.pattern.permute.xlu0 0
  %87 = vperm.xlu0 %86, %v44
  %v88 = vpop.permute.xlu0 %87
  %v98 = vunpack.c.l.b16 %v29
  %v99 = vunpack.c.l.b16 %v30
  %v100 = vunpack.c.l.b16 %v31
  %v101 = vunpack.c.l.b16 %v32
  %v102 = vunpack.c.l.b16 %v33
  %v103 = vunpack.c.l.b16 %v34
  %v104 = vunpack.c.l.b16 %v35
  %v105 = vunpack.c.l.b16 %v36
  %v106 = vpack.c.b16 %v99, %v98
  %v107 = vpack.c.b16 %v101, %v100
  %v108 = vpack.c.b16 %v103, %v102
  %v109 = vpack.c.b16 %v105, %v104
  %vm110 = vcmask 64512
  %v112 = vsel %vm110, %v106, 0
  %v115 = vsel %vm110, %v107, 0
  %v118 = vsel %vm110, %v108, 0
  %v121 = vsel %vm110, %v109, 0
  %vm123 = vcmask 1043456
  %v125 = vsel %vm123, %v48, 0
  %v128 = vsel %vm123, %v49, 0
  %130 = vmatprep.subr.bf16.mxu0 %v128
  %131 = vmatpush1.bf16.msra.mxu0 %v125
  %132 = vmatprep.subr.bf16.mxu0 0
  %133 = vmatpush1.bf16.msra.mxu0 0
  %134 = vmatprep.subr.bf16.mxu0 0
  %135 = vmatpush1.bf16.msra.mxu0 0
  %136 = vmatprep.subr.bf16.mxu0 0
  %137 = vmatpush1.bf16.msra.mxu0 0
  %138 = vmatprep.subr.bf16.mxu0 0
  %139 = vmatpush1.bf16.msra.mxu0 0
  %140 = vmatprep.subr.bf16.mxu0 0
  %141 = vmatpush1.bf16.msra.mxu0 0
  %142 = vmatprep.subr.bf16.mxu0 0
  %143 = vmatpush1.bf16.msra.mxu0 0
  %144 = vmatprep.subr.bf16.mxu0 0
  %145 = vmatpush1.bf16.msra.mxu0 0
  %146 = vmatprep.subr.bf16.mxu0 0
  %147 = vmatpush1.bf16.msra.mxu0 0
  %148 = vmatprep.subr.bf16.mxu0 0
  %149 = vmatpush1.bf16.msra.mxu0 0
  %150 = vmatprep.subr.bf16.mxu0 0
  %151 = vmatpush1.bf16.msra.mxu0 0
  %152 = vmatprep.subr.bf16.mxu0 0
  %153 = vmatpush1.bf16.msra.mxu0 0
  %154 = vmatprep.subr.bf16.mxu0 0
  %155 = vmatpush1.bf16.msra.mxu0 0
  %156 = vmatprep.subr.bf16.mxu0 0
  %157 = vmatpush1.bf16.msra.mxu0 0
  %158 = vmatprep.subr.bf16.mxu0 0
  %159 = vmatpush1.bf16.msra.mxu0 0
  %160 = vmatprep.subr.bf16.mxu0 0
  %161 = vmatpush1.bf16.msra.mxu0 0
  %162 = vmatprep.mubr.bf16.mxu0 0
  %163 = vmatmul.mubr.bf16.gmra.mrb[0].mxu0 %v112
  %v164 = vpop.f32.mrb[0].mxu0
  %v165 = vadd.f32 %v53, %v164
  %v166 = vpop.f32.mrb[0].mxu0
  %v167 = vadd.f32 %v53, %v166
  %v168 = vpop.f32.mrb[0].mxu0
  %v169 = vadd.f32 %v58, %v168
  %v170 = vpop.f32.mrb[0].mxu0
  %v171 = vadd.f32 %v58, %v170
  %172 = vmatprep.mubr.bf16.mxu0 0
  %173 = vmatmul.mubr.bf16.gmra.mrb[0].mxu0 %v115
  %v174 = vpop.f32.mrb[0].mxu0
  %v175 = vadd.f32 %v63, %v174
  %v176 = vpop.f32.mrb[0].mxu0
  %v177 = vadd.f32 %v63, %v176
  %v178 = vpop.f32.mrb[0].mxu0
  %v179 = vadd.f32 %v68, %v178
  %v180 = vpop.f32.mrb[0].mxu0
  %v181 = vadd.f32 %v68, %v180
  %182 = vmatprep.mubr.bf16.mxu0 0
  %183 = vmatmul.mubr.bf16.gmra.mrb[0].mxu0 %v118
  %v184 = vpop.f32.mrb[0].mxu0
  %v185 = vadd.f32 %v73, %v184
  %v186 = vpop.f32.mrb[0].mxu0
  %v187 = vadd.f32 %v73, %v186
  %v188 = vpop.f32.mrb[0].mxu0
  %v189 = vadd.f32 %v78, %v188
  %v190 = vpop.f32.mrb[0].mxu0
  %v191 = vadd.f32 %v78, %v190
  %192 = vmatprep.mubr.bf16.mxu0 0
  %193 = vmatmul.mubr.bf16.gmra.mrb[0].mxu0 %v121
  %v194 = vpop.f32.mrb[0].mxu0
  %v195 = vadd.f32 %v83, %v194
  %v196 = vpop.f32.mrb[0].mxu0
  %v197 = vadd.f32 %v83, %v196
  %v198 = vpop.f32.mrb[0].mxu0
  %v199 = vadd.f32 %v88, %v198
  %v200 = vpop.f32.mrb[0].mxu0
  %v201 = vadd.f32 %v88, %v200
  %202 = vdwg.mxu0
  %v203 = vmax.f32 %v165, 0.0
  %v204 = vmax.f32 %v167, 0.0
  %v205 = vmax.f32 %v169, 0.0
  %v206 = vmax.f32 %v171, 0.0
  %v207 = vmax.f32 %v175, 0.0
  %v208 = vmax.f32 %v177, 0.0
  %v209 = vmax.f32 %v179, 0.0
  %v210 = vmax.f32 %v181, 0.0
  %v211 = vmax.f32 %v185, 0.0
  %v212 = vmax.f32 %v187, 0.0
  %v213 = vmax.f32 %v189, 0.0
  %v214 = vmax.f32 %v191, 0.0
  %v215 = vmax.f32 %v195, 0.0
  %v216 = vmax.f32 %v197, 0.0
  %v217 = vmax.f32 %v199, 0.0
  %v218 = vmax.f32 %v201, 0.0
  %vm219 = vcmask 523264
  %v221 = vsel %vm219, %v45, 0
  %223 = vmatprep.subr.mxu0 %v204
  %224 = vmatpush1.msra.mxu0 %v203
  %225 = vmatprep.subr.mxu0 %v206
  %226 = vmatpush1.msra.mxu0 %v205
  %227 = vmatprep.subr.mxu0 %v208
  %228 = vmatpush1.msra.mxu0 %v207
  %229 = vmatprep.subr.mxu0 %v210
  %230 = vmatpush1.msra.mxu0 %v209
  %231 = vmatprep.subr.mxu0 %v212
  %232 = vmatpush1.msra.mxu0 %v211
  %233 = vmatprep.subr.mxu0 %v214
  %234 = vmatpush1.msra.mxu0 %v213
  %235 = vmatprep.subr.mxu0 %v216
  %236 = vmatpush1.msra.mxu0 %v215
  %237 = vmatprep.subr.mxu0 %v218
  %238 = vmatpush1.msra.mxu0 %v217
  %239 = vmatprep.subr.mxu0 0.0
  %240 = vmatpush1.msra.mxu0 0.0
  %241 = vmatprep.subr.mxu0 0.0
  %242 = vmatpush1.msra.mxu0 0.0
  %243 = vmatprep.subr.mxu0 0.0
  %244 = vmatpush1.msra.mxu0 0.0
  %245 = vmatprep.subr.mxu0 0.0
  %246 = vmatpush1.msra.mxu0 0.0
  %247 = vmatprep.subr.mxu0 0.0
  %248 = vmatpush1.msra.mxu0 0.0
  %249 = vmatprep.subr.mxu0 0.0
  %250 = vmatpush1.msra.mxu0 0.0
  %251 = vmatprep.subr.mxu0 0.0
  %252 = vmatpush1.msra.mxu0 0.0
  %253 = vmatprep.subr.mxu0 0.0
  %254 = vmatpush1.msra.mxu0 0.0
  %255 = vmatprep.subr.mxu0 0.0
  %256 = vmatpush1.msra.mxu0 0.0
  %257 = vmatprep.subr.mxu0 0.0
  %258 = vmatpush1.msra.mxu0 0.0
  %259 = vmatprep.subr.mxu0 0.0
  %260 = vmatpush1.msra.mxu0 0.0
  %261 = vmatprep.subr.mxu0 0.0
  %262 = vmatpush1.msra.mxu0 0.0
  %263 = vmatprep.subr.mxu0 0.0
  %264 = vmatpush1.msra.mxu0 0.0
  %265 = vmatprep.subr.mxu0 0.0
  %266 = vmatpush1.msra.mxu0 0.0
  %267 = vmatprep.subr.mxu0 0.0
  %268 = vmatpush1.msra.mxu0 0.0
  %269 = vmatprep.subr.mxu0 0.0
  %270 = vmatpush1.msra.mxu0 0.0
  %271 = vmatprep.subr.mxu0 0.0
  %272 = vmatpush1.msra.mxu0 0.0
  %273 = vmatprep.subr.mxu0 0.0
  %274 = vmatpush1.msra.mxu0 0.0
  %275 = vmatprep.subr.mxu0 0.0
  %276 = vmatpush1.msra.mxu0 0.0
  %277 = vmatprep.subr.mxu0 0.0
  %278 = vmatpush1.msra.mxu0 0.0
  %279 = vmatprep.subr.mxu0 0.0
  %280 = vmatpush1.msra.mxu0 0.0
  %281 = vmatprep.subr.mxu0 0.0
  %282 = vmatpush1.msra.mxu0 0.0
  %283 = vmatprep.subr.mxu0 0.0
  %284 = vmatpush1.msra.mxu0 0.0
  %285 = vmatprep.subr.mxu0 0.0
  %286 = vmatpush1.msra.mxu0 0.0
  %287 = vmatprep.mubr.f32.mxu0 0.0
  %288 = vmatmul.mubr.f32.gmra.mrb[0].mxu0 %v221
  %v289 = vpop.f32.mrb[0].mxu0
  %v290 = vadd.f32 0.0, %v289
  %v291 = vpop.f32.mrb[0].mxu0
  %v292 = vadd.f32 0.0, %v291
  %293 = vdwg.mxu0
  %v294 = vld [vmem:[#allocation2] sm:$0x3]
  %vm295 = vcmask 1041408
  %v296 = vsel %vm295, %v290, 0.0
  %v297 = vsel %vm295, %v292, 0.0
  %v298 = vadd.f32 %v296, %v297
  %299 = vadd.xlane.f32.xlu0 %v298
  %v300 = vpop.xlane.xlu0 %299
  %v301 = vadd.f32 %v294, %v300
  %vm302 = vcmask 1024
  %303 = vst.msk [vmem:[#allocation2] sm:$0x3] %vm302, %v301
  // Predicated region
  $region26: #{tpu_custom_call.1} parent=0 // pred_check
    %p304 = pneg %p23
  $region27: #{tpu_custom_call.1} parent=0 // pred_check_branch
    %306 = sbr.rel (%p304) target = $region29
  $region28: #{tpu_custom_call.1} parent=0 // pred_region
    %v307 = vld [vmem:[#allocation2] sm:$0x3]
    %v308 = vld [vmem:[#allocation3] sm:$0x1]
    %v310 = vlaneseq
    %v311 = vshrl.u32 %v310, 7
    %v312 = vsub.s32 0, %v311
    %v313 = vrot.slane %v308, %v312
    %v315 = vadd.f32 %v307, %v313
    %316 = vst.msk [vmem:[%s5] sm:$0x3] %vm302, %v315
  $region29: #{tpu_custom_call.1} parent=0 // pred_fallthru
    _
  // Predicated region
  $region30: #{tpu_custom_call.1} parent=0 // pred_check
    _
  $region31: #{tpu_custom_call.1} parent=0 // pred_check_branch
    %318 = sbr.rel (0) target = $region33
  $region32: #{tpu_custom_call.1} parent=0 // pred_region
    _
  $region33: #{tpu_custom_call.1} parent=0 // pred_fallthru
    _
  // Predicated region
  $region34: #{tpu_custom_call.1} parent=0 // pred_check
    _
  $region35: #{tpu_custom_call.1} parent=0 // pred_check_branch
    %320 = sbr.rel (0) target = $region37
  $region36: #{tpu_custom_call.1} parent=0 // pred_region
    _
  $region37: #{tpu_custom_call.1} parent=0 // pred_fallthru
    _

</llo_original>
